<compile_context>
chip_gen: v5e
topology: v5e:2x2
jax: 0.10.0
libtpu: 0.0.40
codegen_flags: <defaults>
</compile_context>

<pallas_src>
import functools

import jax
import jax.numpy as jnp
from jax import lax
from jax.experimental import pallas as pl
from jax.experimental.pallas import tpu as pltpu

EPS = 1e-5          # nn.InstanceNorm2d default eps
NEG_SLOPE = 0.2     # nn.LeakyReLU(0.2)


def _vmem_limit_bytes() -> int:
    """Generation-aware VMEM budget (leave headroom for Mosaic scratch)."""
    try:
        cap = int(pltpu.get_tpu_info().vmem_capacity_bytes)
    except Exception:
        cap = 64 * 1024 * 1024          # conservative (v7x per-TC size)
    return max(32 * 1024 * 1024, min(cap - 24 * 1024 * 1024, 100 * 1024 * 1024))


def _unet_down_kernel(cols_ref, w_ref, o_ref, *, ow):
    # cols_ref: (1, 2, (OH+1)*OW, 4*Cin) bf16
    #           cols[di, u*OW+v, j*Cin+c] = x_pad[2u+di, 2v+j, c]
    # w_ref   : (4, 4*Cin, Cp)            bf16   w[i, j*Cin+c, o] = W[o,c,i,j]
    # o_ref   : (1, P, Cp)                bf16   InstanceNorm+LeakyReLU output
    p = o_ref.shape[1]

    # Conv(4x4, stride 2, pad 1) as 4 matmuls: row tap i = 2*r + di reads the
    # contiguous row window [r*OW : r*OW + P] of row-phase di; the 4 column
    # taps are already folded into the contraction dim (K = 4*Cin).
    acc = None
    for di in range(2):
        for r in range(2):
            lhs = cols_ref[0, di, r * ow:r * ow + p, :]        # (P, 4*Cin) bf16
            term = jnp.dot(lhs, w_ref[2 * r + di],
                           preferred_element_type=jnp.float32)  # MXU, f32 acc
            acc = term if acc is None else acc + term

    # InstanceNorm2d (affine=False): mean-shifted variance over spatial dim.
    inv_p = 1.0 / float(p)
    mean = jnp.sum(acc, axis=0, keepdims=True) * inv_p          # (1, Cp)
    centered = acc - mean
    var = jnp.sum(centered * centered, axis=0, keepdims=True) * inv_p
    y = centered * lax.rsqrt(var + EPS)

    # LeakyReLU(0.2), then cast to bf16 for the HBM writeback.
    y = jnp.where(y >= 0, y, NEG_SLOPE * y)
    o_ref[0] = y.astype(o_ref.dtype)


@jax.jit
def unet_down(x_nchw, weight, bias):
    """x_nchw: (N, Cin, H, W); weight: (Cout, Cin, 4, 4); bias: (Cout,).

    bias is accepted for interface parity with nn.Conv2d but not applied:
    InstanceNorm2d (affine=False) cancels a per-channel bias exactly.
    Returns bf16 activations (inputs/weights are fed to the MXU in bf16).
    """
    del bias
    n, cin, h, w = x_nchw.shape
    cout, cin_w, kh, kw = weight.shape
    assert (kh, kw) == (4, 4) and cin_w == cin and h % 2 == 0 and w % 2 == 0
    oh, ow = h // 2, w // 2
    p = oh * ow
    k4 = 4 * cin
    # Lane-pad Cout only when it is already >= 128 (item: avoid 16x writeback
    # waste for small Cout; masked stores are cheaper than padded channels).
    cp = ((cout + 127) // 128) * 128 if cout >= 128 else cout

    # ---- wrapper relayout, entirely in bf16 (pure layout glue) ----
    xb = x_nchw.astype(jnp.bfloat16)
    x_nhwc = jnp.transpose(xb, (0, 2, 3, 1))                     # (N, H, W, Cin)
    x_pad = jnp.pad(x_nhwc, ((0, 0), (1, 1), (1, 1), (0, 0)))    # (N, H+2, W+2, Cin)

    # Row-phase split (di) + fold the 4 column taps into channels:
    #   cols[n, di, u*OW+v, j*Cin+c] = x_pad[n, 2u+di, 2v+j, c]
    planes = []
    for di in (0, 1):
        rows = x_pad[:, di::2, :, :]                             # (N, OH+1, W+2, Cin)
        taps = [rows[:, :, j::2, :][:, :, :ow, :] for j in range(4)]
        planes.append(jnp.concatenate(taps, axis=-1))            # (N, OH+1, OW, 4*Cin)
    cols = jnp.stack(planes, axis=1).reshape(n, 2, (oh + 1) * ow, k4)

    # Per-row-tap weights: w_fold[i, j*Cin+c, o] = weight[o, c, i, j].
    w_fold = jnp.transpose(weight, (2, 3, 1, 0)).reshape(4, k4, cout)
    w_fold = w_fold.astype(jnp.bfloat16)
    if cp != cout:
        w_fold = jnp.pad(w_fold, ((0, 0), (0, 0), (0, cp - cout)))

    kernel = functools.partial(_unet_down_kernel, ow=ow)
    out = pl.pallas_call(
        kernel,
        out_shape=jax.ShapeDtypeStruct((n, p, cp), jnp.bfloat16),
        grid_spec=pltpu.PrefetchScalarGridSpec(
            num_scalar_prefetch=0,
            grid=(n,),
            in_specs=[
                # Two row-phase planes per sample.
                pl.BlockSpec((1, 2, (oh + 1) * ow, k4), lambda i: (i, 0, 0, 0)),
                # Full weight tensor, grid-invariant (resident across batch).
                pl.BlockSpec((4, k4, cp), lambda i: (0, 0, 0)),
            ],
            out_specs=pl.BlockSpec((1, p, cp), lambda i: (i, 0, 0)),
        ),
        compiler_params=pltpu.CompilerParams(
            dimension_semantics=("parallel",),
            vmem_limit_bytes=_vmem_limit_bytes(),
        ),
    )(cols, w_fold)

    # (N, P, Cp) -> drop channel padding (no-op when Cout < 128) -> NCHW.
    out = out[:, :, :cout].reshape(n, oh, ow, cout)
    return jnp.transpose(out, (0, 3, 1, 2))


def _reference(x_nchw, weight, bias):
    """Pure-JAX f32 reference matching the PyTorch module (for verification)."""
    y = lax.conv_general_dilated(
        x_nchw.astype(jnp.float32), weight.astype(jnp.float32),
        window_strides=(2, 2), padding=((1, 1), (1, 1)),
        dimension_numbers=("NCHW", "OIHW", "NCHW"),
        precision=lax.Precision.HIGHEST)
    y = y + bias.reshape(1, -1, 1, 1)
    mean = jnp.mean(y, axis=(2, 3), keepdims=True)
    var = jnp.mean((y - mean) ** 2, axis=(2, 3), keepdims=True)
    y = (y - mean) * lax.rsqrt(var + EPS)
    return jnp.where(y >= 0, y, NEG_SLOPE * y)


if __name__ == "__main__":
    # Small shapes consistent with UNetDown(in_size=4, out_size=8).
    N, CIN, H, W = 2, 4, 16, 16
    COUT, KH, KW = 8, 4, 4

    key = jax.random.PRNGKey(0)
    kx, kw_, kb = jax.random.split(key, 3)
    x = jax.random.normal(kx, (N, CIN, H, W), dtype=jnp.float32)

    # Deterministic PyTorch-style Conv2d init: U(-k, k), k = 1/sqrt(Cin*KH*KW).
    fan_in = CIN * KH * KW
    bound = 1.0 / (fan_in ** 0.5)
    weight = jax.random.uniform(kw_, (COUT, CIN, KH, KW),
                                minval=-bound, maxval=bound, dtype=jnp.float32)
    bias = jax.random.uniform(kb, (COUT,), minval=-bound, maxval=bound,
                              dtype=jnp.float32)

    out = jax.block_until_ready(unet_down(x, weight, bias))
    ref = jax.block_until_ready(_reference(x, weight, bias))

    assert out.shape == (N, COUT, H // 2, W // 2), out.shape
    # 5e-2 tolerance covers bf16 MXU inputs + bf16 output rounding (f32
    # accumulation / epilogue); any indexing/semantics bug gives O(1) errors.
    err = float(jnp.max(jnp.abs(out.astype(jnp.float32) - ref)))
    assert err < 5e-2, err

    print("KERNEL_OK")
</pallas_src>

<mosaic_0001>
module attributes {stable_mosaic.version = 11 : i64} {
  func.func @_unet_down_kernel(%arg0: i32, %arg1: memref<1x2x72x16xbf16, #tpu.memory_space<vmem>>, %arg2: memref<4x16x8xbf16, #tpu.memory_space<vmem>>, %arg3: memref<1x64x8xbf16, #tpu.memory_space<vmem>>) attributes {dimension_semantics = [#tpu.dimension_semantics<parallel>], iteration_bounds = array<i64: 2>, scalar_prefetch = 0 : i64, scratch_operands = 0 : i64, tpu.core_type = #tpu.core_type<tc>, window_params = [{transform_indices = @transform_0, window_bounds = array<i64: 1, 2, 72, 16>}, {pipeline_mode = #tpu.pipeline_mode<synchronous>, transform_indices = @transform_1, window_bounds = array<i64: 4, 16, 8>}, {transform_indices = @transform_2, window_bounds = array<i64: 1, 64, 8>}]} {
    %c0 = arith.constant 0 : index
    %c0_0 = arith.constant 0 : index
    %c0_1 = arith.constant 0 : index
    %c0_2 = arith.constant 0 : index
    %0 = vector.load %arg1[%c0, %c0_0, %c0_1, %c0_2] : memref<1x2x72x16xbf16, #tpu.memory_space<vmem>>, vector<1x1x64x16xbf16>
    %1 = vector.shape_cast %0 : vector<1x1x64x16xbf16> to vector<64x16xbf16>
    %c0_3 = arith.constant 0 : index
    %c0_4 = arith.constant 0 : index
    %c0_5 = arith.constant 0 : index
    %2 = vector.load %arg2[%c0_3, %c0_4, %c0_5] : memref<4x16x8xbf16, #tpu.memory_space<vmem>>, vector<1x16x8xbf16>
    %3 = vector.shape_cast %2 : vector<1x16x8xbf16> to vector<16x8xbf16>
    %cst = arith.constant dense<0.000000e+00> : vector<64x8xf32>
    %4 = tpu.matmul %1, %3, %cst {dimension_numbers = #tpu.dot_dimension_numbers<[1], [0], [0], [1], [0, 0, 1, 1], [], []>} : vector<64x16xbf16>, vector<16x8xbf16>, vector<64x8xf32> -> vector<64x8xf32>
    %c0_6 = arith.constant 0 : index
    %c0_7 = arith.constant 0 : index
    %c8 = arith.constant 8 : index
    %c0_8 = arith.constant 0 : index
    %5 = vector.load %arg1[%c0_6, %c0_7, %c8, %c0_8] : memref<1x2x72x16xbf16, #tpu.memory_space<vmem>>, vector<1x1x64x16xbf16>
    %6 = vector.shape_cast %5 : vector<1x1x64x16xbf16> to vector<64x16xbf16>
    %c2 = arith.constant 2 : index
    %c0_9 = arith.constant 0 : index
    %c0_10 = arith.constant 0 : index
    %7 = vector.load %arg2[%c2, %c0_9, %c0_10] : memref<4x16x8xbf16, #tpu.memory_space<vmem>>, vector<1x16x8xbf16>
    %8 = vector.shape_cast %7 : vector<1x16x8xbf16> to vector<16x8xbf16>
    %cst_11 = arith.constant dense<0.000000e+00> : vector<64x8xf32>
    %9 = tpu.matmul %6, %8, %cst_11 {dimension_numbers = #tpu.dot_dimension_numbers<[1], [0], [0], [1], [0, 0, 1, 1], [], []>} : vector<64x16xbf16>, vector<16x8xbf16>, vector<64x8xf32> -> vector<64x8xf32>
    %10 = arith.addf %4, %9 : vector<64x8xf32>
    %c0_12 = arith.constant 0 : index
    %c1 = arith.constant 1 : index
    %c0_13 = arith.constant 0 : index
    %c0_14 = arith.constant 0 : index
    %11 = vector.load %arg1[%c0_12, %c1, %c0_13, %c0_14] : memref<1x2x72x16xbf16, #tpu.memory_space<vmem>>, vector<1x1x64x16xbf16>
    %12 = vector.shape_cast %11 : vector<1x1x64x16xbf16> to vector<64x16xbf16>
    %c1_15 = arith.constant 1 : index
    %c0_16 = arith.constant 0 : index
    %c0_17 = arith.constant 0 : index
    %13 = vector.load %arg2[%c1_15, %c0_16, %c0_17] : memref<4x16x8xbf16, #tpu.memory_space<vmem>>, vector<1x16x8xbf16>
    %14 = vector.shape_cast %13 : vector<1x16x8xbf16> to vector<16x8xbf16>
    %cst_18 = arith.constant dense<0.000000e+00> : vector<64x8xf32>
    %15 = tpu.matmul %12, %14, %cst_18 {dimension_numbers = #tpu.dot_dimension_numbers<[1], [0], [0], [1], [0, 0, 1, 1], [], []>} : vector<64x16xbf16>, vector<16x8xbf16>, vector<64x8xf32> -> vector<64x8xf32>
    %16 = arith.addf %10, %15 : vector<64x8xf32>
    %c0_19 = arith.constant 0 : index
    %c1_20 = arith.constant 1 : index
    %c8_21 = arith.constant 8 : index
    %c0_22 = arith.constant 0 : index
    %17 = vector.load %arg1[%c0_19, %c1_20, %c8_21, %c0_22] : memref<1x2x72x16xbf16, #tpu.memory_space<vmem>>, vector<1x1x64x16xbf16>
    %18 = vector.shape_cast %17 : vector<1x1x64x16xbf16> to vector<64x16xbf16>
    %c3 = arith.constant 3 : index
    %c0_23 = arith.constant 0 : index
    %c0_24 = arith.constant 0 : index
    %19 = vector.load %arg2[%c3, %c0_23, %c0_24] : memref<4x16x8xbf16, #tpu.memory_space<vmem>>, vector<1x16x8xbf16>
    %20 = vector.shape_cast %19 : vector<1x16x8xbf16> to vector<16x8xbf16>
    %cst_25 = arith.constant dense<0.000000e+00> : vector<64x8xf32>
    %21 = tpu.matmul %18, %20, %cst_25 {dimension_numbers = #tpu.dot_dimension_numbers<[1], [0], [0], [1], [0, 0, 1, 1], [], []>} : vector<64x16xbf16>, vector<16x8xbf16>, vector<64x8xf32> -> vector<64x8xf32>
    %22 = arith.addf %16, %21 : vector<64x8xf32>
    %cst_26 = arith.constant dense<0.000000e+00> : vector<8xf32>
    %23 = vector.multi_reduction <add>, %22, %cst_26 [0] : vector<64x8xf32> to vector<8xf32>
    %24 = vector.shape_cast %23 : vector<8xf32> to vector<1x8xf32>
    %cst_27 = arith.constant 1.562500e-02 : f32
    %25 = vector.broadcast %cst_27 : f32 to vector<1x8xf32>
    %26 = arith.mulf %24, %25 : vector<1x8xf32>
    %27 = vector.broadcast %26 : vector<1x8xf32> to vector<64x8xf32>
    %28 = arith.subf %22, %27 : vector<64x8xf32>
    %29 = arith.mulf %28, %28 : vector<64x8xf32>
    %cst_28 = arith.constant dense<0.000000e+00> : vector<8xf32>
    %30 = vector.multi_reduction <add>, %29, %cst_28 [0] : vector<64x8xf32> to vector<8xf32>
    %31 = vector.shape_cast %30 : vector<8xf32> to vector<1x8xf32>
    %cst_29 = arith.constant 1.562500e-02 : f32
    %32 = vector.broadcast %cst_29 : f32 to vector<1x8xf32>
    %33 = arith.mulf %31, %32 : vector<1x8xf32>
    %cst_30 = arith.constant 9.99999974E-6 : f32
    %34 = vector.broadcast %cst_30 : f32 to vector<1x8xf32>
    %35 = arith.addf %33, %34 : vector<1x8xf32>
    %36 = math.rsqrt %35 : vector<1x8xf32>
    %37 = vector.broadcast %36 : vector<1x8xf32> to vector<64x8xf32>
    %38 = arith.mulf %28, %37 : vector<64x8xf32>
    %cst_31 = arith.constant 0.000000e+00 : f32
    %39 = vector.broadcast %cst_31 : f32 to vector<64x8xf32>
    %40 = arith.cmpf oge, %38, %39 : vector<64x8xf32>
    %cst_32 = arith.constant 2.000000e-01 : f32
    %41 = vector.broadcast %cst_32 : f32 to vector<64x8xf32>
    %42 = arith.mulf %41, %38 : vector<64x8xf32>
    %43 = arith.select %40, %38, %42 : vector<64x8xi1>, vector<64x8xf32>
    %44 = arith.truncf %43 : vector<64x8xf32> to vector<64x8xbf16>
    %c0_33 = arith.constant 0 : index
    %c0_34 = arith.constant 0 : index
    %c0_35 = arith.constant 0 : index
    %45 = vector.load %arg3[%c0_33, %c0_34, %c0_35] : memref<1x64x8xbf16, #tpu.memory_space<vmem>>, vector<1x64x8xbf16>
    %46 = vector.shape_cast %45 : vector<1x64x8xbf16> to vector<64x8xbf16>
    %47 = vector.shape_cast %44 : vector<64x8xbf16> to vector<1x64x8xbf16>
    tpu.vector_store %arg3[%c0_33, %c0_34, %c0_35], %47 {strides = array<i32>} : memref<1x64x8xbf16, #tpu.memory_space<vmem>>, vector<1x64x8xbf16>,
    return
  }
  func.func @transform_0(%arg0: i32) -> (i32, i32, i32, i32) {
    %c0_i32 = arith.constant 0 : i32
    %c0_i32_0 = arith.constant 0 : i32
    %c0_i32_1 = arith.constant 0 : i32
    %c0_i32_2 = arith.constant 0 : i32
    return %arg0, %c0_i32, %c0_i32_0, %c0_i32_1 : i32, i32, i32, i32
  }
  func.func @transform_1(%arg0: i32) -> (i32, i32, i32) {
    %c0_i32 = arith.constant 0 : i32
    %c0_i32_0 = arith.constant 0 : i32
    %c0_i32_1 = arith.constant 0 : i32
    %c0_i32_2 = arith.constant 0 : i32
    return %c0_i32, %c0_i32_0, %c0_i32_1 : i32, i32, i32
  }
  func.func @transform_2(%arg0: i32) -> (i32, i32, i32) {
    %c0_i32 = arith.constant 0 : i32
    %c0_i32_0 = arith.constant 0 : i32
    %c0_i32_1 = arith.constant 0 : i32
    return %arg0, %c0_i32, %c0_i32_0 : i32, i32, i32
  }
}

</mosaic_0001>

<llo_original>
// kernel: unet_down.1
$region0: #{unet_down.1}
  #allocation0 [shape = 'u32[]', space=smem, size = 0x4, offset = 0x4, fixed_abs, tag = 'smem constant byte address 0x4 - core index']
  #allocation1 [shape = 'u32[72,128]{1,0:T(1,128)}', space=vmem, size = 0x9000, scoped, tag = 'internal scratch']
  %s0 = inlined_call_operand.vmem [shape: bf16[2,2,72,16], index: 0, kind: input, shape index: {}]
  %s1 = inlined_call_operand.vmem [shape: bf16[4,16,8], index: 1, kind: input, shape index: {}]
  %s2 = inlined_call_operand.vmem [shape: bf16[2,64,8], index: 2, kind: output, shape index: {}]
  %s3 = sld [smem:[#allocation0]]
  $region41: #{unet_down.1} parent=0
    _
  %s5 = ssub.s32 1, %s3
  %s6 = scalar_select 0, %s5, %s3
  loop: start=0, step=1, limit=4
  $region2: #{unet_down.1} parent=0 // loop_pre_header
    _
  $region3: #{unet_down.1} parent=0 // loop_header
    %s8 = sphi 0, %s12
    %p9 = scmp.ge.s32.totalorder %s8, 4
    %s18 = sphi 0, %s20
    %s21 = sphi 0, %s18
    %s22 = sphi 0, %s21
    %s38 = sphi 0, %s22
    %s42 = sphi 0, %s42
    %s44 = sphi 0, %s42
    %s45 = sphi 0, %s44
    %s59 = sphi 0, %s45
    %s65 = sphi 0, %s67
    %s68 = sphi 0, %s65
    %s69 = sphi 0, %s68
    %s85 = sphi 0, %s69
  $region4: #{unet_down.1} parent=0 // loop_header_branch
    %11 = sbr.rel (%p9) target = $region8
  $region5: #{unet_down.1} parent=0 // loop_body
    %s13 = ssub.s32 %s8, 1
    %s14 = ssub.s32 %s8, 2
    %s15 = sadd.s32 %s8, 1
    %s16 = ssub.s32 %s8, %s15
    %p17 = scmp.eq.s32.totalorder %s16, 0
    %s19 = sadd.s32 %s18, 1
    %s20 = scalar_select %p17, %s18, %s19
    %p23 = pneg %p17
    %p24 = scmp.eq.s32.totalorder %s8, 1
    %p25 = por %p23, %p24
    %p26 = scmp.ne.s32.totalorder %s18, %s21
    %p27 = scmp.eq.s32.totalorder %s8, 0
    %p28 = por %p26, %p27
    %p29 = scmp.ne.s32.totalorder %s18, %s21
    %p30 = scmp.eq.s32.totalorder %s13, 1
    %p31 = por %p29, %p30
    %p32 = scmp.ne.s32.totalorder %s21, %s22
    %p33 = scmp.eq.s32.totalorder %s13, 0
    %p34 = por %p32, %p33
    %p35 = scmp.ne.s32.totalorder %s21, %s22
    %p36 = scmp.eq.s32.totalorder %s14, 1
    %p37 = por %p35, %p36
    %p39 = scmp.ne.s32.totalorder %s22, %s38
    %p40 = scmp.eq.s32.totalorder %s14, 0
    %p41 = por %p39, %p40
    %s43 = sadd.s32 %s42, 1
    %p46 = scmp.eq.s32.totalorder %s8, 1
    %p47 = scmp.ne.s32.totalorder %s42, %s44
    %p48 = scmp.eq.s32.totalorder %s8, 0
    %p49 = por %p47, %p48
    %p50 = scmp.ne.s32.totalorder %s42, %s44
    %p51 = scmp.eq.s32.totalorder %s13, 1
    %p52 = por %p50, %p51
    %p53 = scmp.ne.s32.totalorder %s44, %s45
    %p54 = scmp.eq.s32.totalorder %s13, 0
    %p55 = por %p53, %p54
    %p56 = scmp.ne.s32.totalorder %s44, %s45
    %p57 = scmp.eq.s32.totalorder %s14, 1
    %p58 = por %p56, %p57
    %p60 = scmp.ne.s32.totalorder %s45, %s59
    %p61 = scmp.eq.s32.totalorder %s14, 0
    %p62 = por %p60, %p61
    %s63 = ssub.s32 %s8, %s15
    %p64 = scmp.eq.s32.totalorder %s63, 0
    %s66 = sadd.s32 %s65, 1
    %s67 = scalar_select %p64, %s65, %s66
    %p70 = pneg %p64
    %p71 = scmp.eq.s32.totalorder %s8, 1
    %p72 = por %p70, %p71
    %p73 = scmp.ne.s32.totalorder %s65, %s68
    %p74 = scmp.eq.s32.totalorder %s8, 0
    %p75 = por %p73, %p74
    %p76 = scmp.ne.s32.totalorder %s65, %s68
    %p77 = scmp.eq.s32.totalorder %s13, 1
    %p78 = por %p76, %p77
    %p79 = scmp.ne.s32.totalorder %s68, %s69
    %p80 = scmp.eq.s32.totalorder %s13, 0
    %p81 = por %p79, %p80
    %p82 = scmp.ne.s32.totalorder %s68, %s69
    %p83 = scmp.eq.s32.totalorder %s14, 1
    %p84 = por %p82, %p83
    %p86 = scmp.ne.s32.totalorder %s69, %s85
    %p87 = scmp.eq.s32.totalorder %s14, 0
    %p88 = por %p86, %p87
    %p89 = scmp.le.s32.totalorder 1, %s8
    %p90 = scmp.lt.s32.totalorder %s8, 3
    %p91 = pnand %p89, %p90
    %p92 = pneg %p91
    // Predicated region
    $region9: #{unet_down.1} parent=5 // pred_check
      _
    $region10: #{unet_down.1} parent=5 // pred_check_branch
      %94 = sbr.rel (%p91) target = $region12
    $region11: #{unet_down.1} parent=5 // pred_region
      %s95 = ssub.s32 %s8, 1
      // Predicated region
      $region13: #{unet_down.1} parent=11 // pred_check
        %p96 = pneg %p55
      $region14: #{unet_down.1} parent=11 // pred_check_branch
        %98 = sbr.rel (%p96) target = $region16
      $region15: #{unet_down.1} parent=11 // pred_region
        _
      $region16: #{unet_down.1} parent=11 // pred_fallthru
        _
    $region12: #{unet_down.1} parent=5 // pred_fallthru
      _
    %p99 = scmp.lt.s32.totalorder %s8, 2
    // Predicated region
    $region17: #{unet_down.1} parent=5 // pred_check
      %p100 = pneg %p99
    $region18: #{unet_down.1} parent=5 // pred_check_branch
      %102 = sbr.rel (%p100) target = $region20
    $region19: #{unet_down.1} parent=5 // pred_region
      // Predicated region
      $region21: #{unet_down.1} parent=19 // pred_check
        %p103 = pneg %p28
      $region22: #{unet_down.1} parent=19 // pred_check_branch
        %105 = sbr.rel (%p103) target = $region24
      $region23: #{unet_down.1} parent=19 // pred_region
        %p106 = scmp.lt.s32.totalorder %s8, 1
        %s107 = scalar_select %p106, %s8, 1
        %s108 = smul.addr %s107, 18
        %s109 = smul.addr %s108, 4
        %s110 = scalar_lea.vmem %s0, %s109
      $region24: #{unet_down.1} parent=19 // pred_fallthru
        _
    $region20: #{unet_down.1} parent=5 // pred_fallthru
      _
    %p111 = scmp.le.s32.totalorder 1, %s8
    %p112 = scmp.lt.s32.totalorder %s8, 3
    %p113 = pnand %p111, %p112
    %p114 = pneg %p113
    // Predicated region
    $region25: #{unet_down.1} parent=5 // pred_check
      _
    $region26: #{unet_down.1} parent=5 // pred_check_branch
      %116 = sbr.rel (%p113) target = $region28
    $region27: #{unet_down.1} parent=5 // pred_region
      %s117 = ssub.s32 %s8, 1
      %p118 = scmp.lt.s32.totalorder %s13, 1
      %s119 = scalar_select %p118, %s13, 1
      %s120 = smul.addr %s119, 18
      %s121 = smul.addr %s120, 4
      %s122 = scalar_lea.vmem %s0, %s121
      %p123 = pneg %p34
      %p124 = pneg %p31
      %p125 = pneg %p55
      %p126 = pneg %p52
      %p127 = pneg %p81
      %p128 = pneg %p78
      %p129 = scmp.lt.s32.totalorder %s13, 1
      %s130 = scalar_select %p129, %s13, 1
      %s131 = smul.addr %s130, 8
      %s132 = smul.addr %s131, 4
      %s133 = scalar_lea.vmem %s2, %s132
      %p134 = scmp.lt.s32.totalorder %s13, 1
      %s135 = scalar_select %p134, %s13, 1
      %s136 = smul.addr %s135, 18
      %s137 = smul.addr %s136, 4
      %s138 = scalar_lea.vmem %s0, %s137
      %p139 = scmp.lt.s32.totalorder %s13, 1
      %s140 = scalar_select %p139, %s13, 1
      %s141 = smul.addr %s140, 8
      %s142 = smul.addr %s141, 4
      %s143 = scalar_lea.vmem %s2, %s142
      %v145 = vld [vmem:[%s138] sm:$0xf]
      %v146 = vld [vmem:[%s138 + $0x4] sm:$0xf]
      %v147 = vld [vmem:[%s138 + $0x8] sm:$0xf]
      %v148 = vld [vmem:[%s138 + $0xc] sm:$0xf]
      %v149 = vld [vmem:[%s138 + $0x10] sm:$0xf]
      %v150 = vld [vmem:[%s138 + $0x14] sm:$0xf]
      %v151 = vld [vmem:[%s138 + $0x18] sm:$0xf]
      %v152 = vld [vmem:[%s138 + $0x1c] sm:$0xf]
      %v153 = vld [vmem:[%s1] sm:$0xf]
      %v154 = vld [vmem:[%s1 + $0x4] sm:$0xf]
      %v155 = vld [vmem:[%s138 + $0x20] sm:$0xf]
      %s156 = scalar_lea.vmem %s1, 16
      %v157 = vld [vmem:[%s156] sm:$0xf]
      %v158 = vld [vmem:[%s156 + $0x4] sm:$0xf]
      %v167 = vunpack.c.l.b16 %v146
      %v168 = vunpack.c.l.b16 %v147
      %v169 = vunpack.c.l.b16 %v148
      %v170 = vunpack.c.l.b16 %v149
      %v171 = vunpack.c.l.b16 %v150
      %v172 = vunpack.c.l.b16 %v151
      %v173 = vunpack.c.l.b16 %v152
      %v174 = vunpack.c.l.b16 %v155
      %v175 = vpack.c.b16 %v168, %v167
      %v176 = vpack.c.b16 %v170, %v169
      %v177 = vpack.c.b16 %v172, %v171
      %v178 = vpack.c.b16 %v174, %v173
      %v181 = vunpack.c.l.b16 %v157
      %v182 = vunpack.c.l.b16 %v158
      %v183 = vpack.c.b16 %v182, %v181
      %vm185 = vcmask 130048
      %v187 = vsel %vm185, %v175, 0
      %v190 = vsel %vm185, %v176, 0
      %v193 = vsel %vm185, %v177, 0
      %v196 = vsel %vm185, %v178, 0
      %198 = vmatpush.bf16.msra.mxu0 0
      %199 = vmatpush.bf16.msra.mxu0 0
      %200 = vmatpush.bf16.msra.mxu0 0
      %201 = vmatpush.bf16.msra.mxu0 0
      %202 = vmatpush.bf16.msra.mxu0 0
      %203 = vmatpush.bf16.msra.mxu0 0
      %204 = vmatpush.bf16.msra.mxu0 0
      %205 = vmatpush.bf16.msra.mxu0 %v183
      %206 = vmatmul.bf16.gmra.mxu0 %v187
      %v207 = vpop.f32.mrf.mxu0
      %v208 = vadd.f32 0.0, %v207
      %v209 = vpop.f32.mrf.mxu0
      %v210 = vadd.f32 0.0, %v209
      %211 = vmatmul.bf16.gmra.mxu0 %v190
      %v212 = vpop.f32.mrf.mxu0
      %v213 = vadd.f32 0.0, %v212
      %v214 = vpop.f32.mrf.mxu0
      %v215 = vadd.f32 0.0, %v214
      %216 = vmatmul.bf16.gmra.mxu0 %v193
      %v217 = vpop.f32.mrf.mxu0
      %v218 = vadd.f32 0.0, %v217
      %v219 = vpop.f32.mrf.mxu0
      %v220 = vadd.f32 0.0, %v219
      %221 = vmatmul.bf16.gmra.mxu0 %v196
      %v222 = vpop.f32.mrf.mxu0
      %v223 = vadd.f32 0.0, %v222
      %v224 = vpop.f32.mrf.mxu0
      %v225 = vadd.f32 0.0, %v224
      %226 = vdwg.mxu0
      %v228 = vunpack.c.l.b16 %v145
      %v229 = vpack.c.b16 %v167, %v228
      %v230 = vpack.c.b16 %v169, %v168
      %v231 = vpack.c.b16 %v171, %v170
      %v232 = vpack.c.b16 %v173, %v172
      %v235 = vunpack.c.l.b16 %v153
      %v236 = vunpack.c.l.b16 %v154
      %v237 = vpack.c.b16 %v236, %v235
      %v240 = vsel %vm185, %v229, 0
      %v243 = vsel %vm185, %v230, 0
      %v246 = vsel %vm185, %v231, 0
      %v249 = vsel %vm185, %v232, 0
      %251 = vmatpush.bf16.msra.mxu0 0
      %252 = vmatpush.bf16.msra.mxu0 0
      %253 = vmatpush.bf16.msra.mxu0 0
      %254 = vmatpush.bf16.msra.mxu0 0
      %255 = vmatpush.bf16.msra.mxu0 0
      %256 = vmatpush.bf16.msra.mxu0 0
      %257 = vmatpush.bf16.msra.mxu0 0
      %258 = vmatpush.bf16.msra.mxu0 %v237
      %259 = vmatmul.bf16.gmra.mxu0 %v240
      %v260 = vpop.f32.mrf.mxu0
      %v261 = vadd.f32 %v208, %v260
      %v262 = vpop.f32.mrf.mxu0
      %v263 = vadd.f32 %v210, %v262
      %264 = vmatmul.bf16.gmra.mxu0 %v243
      %v265 = vpop.f32.mrf.mxu0
      %v266 = vadd.f32 %v213, %v265
      %v267 = vpop.f32.mrf.mxu0
      %v268 = vadd.f32 %v215, %v267
      %269 = vmatmul.bf16.gmra.mxu0 %v246
      %v270 = vpop.f32.mrf.mxu0
      %v271 = vadd.f32 %v218, %v270
      %v272 = vpop.f32.mrf.mxu0
      %v273 = vadd.f32 %v220, %v272
      %274 = vmatmul.bf16.gmra.mxu0 %v249
      %v275 = vpop.f32.mrf.mxu0
      %v276 = vadd.f32 %v223, %v275
      %v277 = vpop.f32.mrf.mxu0
      %v278 = vadd.f32 %v225, %v277
      %279 = vdwg.mxu0
      %s280 = scalar_lea.vmem %s138, 36
      %v281 = vld [vmem:[%s280] sm:$0xf]
      %v282 = vld [vmem:[%s280 + $0x4] sm:$0xf]
      %v283 = vld [vmem:[%s280 + $0x8] sm:$0xf]
      %v284 = vld [vmem:[%s280 + $0xc] sm:$0xf]
      %v285 = vld [vmem:[%s280 + $0x10] sm:$0xf]
      %v286 = vld [vmem:[%s280 + $0x14] sm:$0xf]
      %v287 = vld [vmem:[%s280 + $0x18] sm:$0xf]
      %v288 = vld [vmem:[%s280 + $0x1c] sm:$0xf]
      %s289 = scalar_lea.vmem %s1, 8
      %v290 = vld [vmem:[%s289] sm:$0xf]
      %v291 = vld [vmem:[%s289 + $0x4] sm:$0xf]
      %v300 = vunpack.c.l.b16 %v281
      %v301 = vunpack.c.l.b16 %v282
      %v302 = vunpack.c.l.b16 %v283
      %v303 = vunpack.c.l.b16 %v284
      %v304 = vunpack.c.l.b16 %v285
      %v305 = vunpack.c.l.b16 %v286
      %v306 = vunpack.c.l.b16 %v287
      %v307 = vunpack.c.l.b16 %v288
      %v308 = vpack.c.b16 %v301, %v300
      %v309 = vpack.c.b16 %v303, %v302
      %v310 = vpack.c.b16 %v305, %v304
      %v311 = vpack.c.b16 %v307, %v306
      %v314 = vunpack.c.l.b16 %v290
      %v315 = vunpack.c.l.b16 %v291
      %v316 = vpack.c.b16 %v315, %v314
      %v319 = vsel %vm185, %v308, 0
      %v322 = vsel %vm185, %v309, 0
      %v325 = vsel %vm185, %v310, 0
      %v328 = vsel %vm185, %v311, 0
      %330 = vmatpush.bf16.msra.mxu0 0
      %331 = vmatpush.bf16.msra.mxu0 0
      %332 = vmatpush.bf16.msra.mxu0 0
      %333 = vmatpush.bf16.msra.mxu0 0
      %334 = vmatpush.bf16.msra.mxu0 0
      %335 = vmatpush.bf16.msra.mxu0 0
      %336 = vmatpush.bf16.msra.mxu0 0
      %337 = vmatpush.bf16.msra.mxu0 %v316
      %338 = vmatmul.bf16.gmra.mxu0 %v319
      %v339 = vpop.f32.mrf.mxu0
      %v340 = vadd.f32 0.0, %v339
      %v341 = vpop.f32.mrf.mxu0
      %v342 = vadd.f32 0.0, %v341
      %343 = vmatmul.bf16.gmra.mxu0 %v322
      %v344 = vpop.f32.mrf.mxu0
      %v345 = vadd.f32 0.0, %v344
      %v346 = vpop.f32.mrf.mxu0
      %v347 = vadd.f32 0.0, %v346
      %348 = vmatmul.bf16.gmra.mxu0 %v325
      %v349 = vpop.f32.mrf.mxu0
      %v350 = vadd.f32 0.0, %v349
      %v351 = vpop.f32.mrf.mxu0
      %v352 = vadd.f32 0.0, %v351
      %353 = vmatmul.bf16.gmra.mxu0 %v328
      %v354 = vpop.f32.mrf.mxu0
      %v355 = vadd.f32 0.0, %v354
      %v356 = vpop.f32.mrf.mxu0
      %v357 = vadd.f32 0.0, %v356
      %358 = vdwg.mxu0
      %v359 = vadd.f32 %v261, %v340
      %v360 = vadd.f32 %v263, %v342
      %v361 = vadd.f32 %v266, %v345
      %v362 = vadd.f32 %v268, %v347
      %v363 = vadd.f32 %v271, %v350
      %v364 = vadd.f32 %v273, %v352
      %v365 = vadd.f32 %v276, %v355
      %v366 = vadd.f32 %v278, %v357
      %v367 = vld [vmem:[%s280 + $0x4] sm:$0xf]
      %v368 = vld [vmem:[%s280 + $0x8] sm:$0xf]
      %v369 = vld [vmem:[%s280 + $0xc] sm:$0xf]
      %v370 = vld [vmem:[%s280 + $0x10] sm:$0xf]
      %v371 = vld [vmem:[%s280 + $0x14] sm:$0xf]
      %v372 = vld [vmem:[%s280 + $0x18] sm:$0xf]
      %v373 = vld [vmem:[%s280 + $0x1c] sm:$0xf]
      %v374 = vld [vmem:[%s280 + $0x20] sm:$0xf]
      %s375 = scalar_lea.vmem %s1, 24
      %v376 = vld [vmem:[%s375] sm:$0xf]
      %v377 = vld [vmem:[%s375 + $0x4] sm:$0xf]
      %v386 = vunpack.c.l.b16 %v367
      %v387 = vunpack.c.l.b16 %v368
      %v388 = vunpack.c.l.b16 %v369
      %v389 = vunpack.c.l.b16 %v370
      %v390 = vunpack.c.l.b16 %v371
      %v391 = vunpack.c.l.b16 %v372
      %v392 = vunpack.c.l.b16 %v373
      %v393 = vunpack.c.l.b16 %v374
      %v394 = vpack.c.b16 %v387, %v386
      %v395 = vpack.c.b16 %v389, %v388
      %v396 = vpack.c.b16 %v391, %v390
      %v397 = vpack.c.b16 %v393, %v392
      %v400 = vunpack.c.l.b16 %v376
      %v401 = vunpack.c.l.b16 %v377
      %v402 = vpack.c.b16 %v401, %v400
      %v405 = vsel %vm185, %v394, 0
      %v408 = vsel %vm185, %v395, 0
      %v411 = vsel %vm185, %v396, 0
      %v414 = vsel %vm185, %v397, 0
      %416 = vmatpush.bf16.msra.mxu0 0
      %417 = vmatpush.bf16.msra.mxu0 0
      %418 = vmatpush.bf16.msra.mxu0 0
      %419 = vmatpush.bf16.msra.mxu0 0
      %420 = vmatpush.bf16.msra.mxu0 0
      %421 = vmatpush.bf16.msra.mxu0 0
      %422 = vmatpush.bf16.msra.mxu0 0
      %423 = vmatpush.bf16.msra.mxu0 %v402
      %424 = vmatmul.bf16.gmra.mxu0 %v405
      %v425 = vpop.f32.mrf.mxu0
      %v426 = vadd.f32 0.0, %v425
      %v427 = vpop.f32.mrf.mxu0
      %v428 = vadd.f32 0.0, %v427
      %429 = vmatmul.bf16.gmra.mxu0 %v408
      %v430 = vpop.f32.mrf.mxu0
      %v431 = vadd.f32 0.0, %v430
      %v432 = vpop.f32.mrf.mxu0
      %v433 = vadd.f32 0.0, %v432
      %434 = vmatmul.bf16.gmra.mxu0 %v411
      %v435 = vpop.f32.mrf.mxu0
      %v436 = vadd.f32 0.0, %v435
      %v437 = vpop.f32.mrf.mxu0
      %v438 = vadd.f32 0.0, %v437
      %439 = vmatmul.bf16.gmra.mxu0 %v414
      %v440 = vpop.f32.mrf.mxu0
      %v441 = vadd.f32 0.0, %v440
      %v442 = vpop.f32.mrf.mxu0
      %v443 = vadd.f32 0.0, %v442
      %444 = vdwg.mxu0
      %v445 = vadd.f32 %v359, %v426
      %v446 = vadd.f32 %v360, %v428
      %v447 = vadd.f32 %v361, %v431
      %v448 = vadd.f32 %v362, %v433
      %v449 = vadd.f32 %v363, %v436
      %v450 = vadd.f32 %v364, %v438
      %v451 = vadd.f32 %v365, %v441
      %v452 = vadd.f32 %v366, %v443
      %vm453 = vcmask 64512
      %v454 = vsel %vm453, %v445, 0.0
      %v455 = vsel %vm453, %v446, 0.0
      %v456 = vadd.f32 %v454, %v455
      %v457 = vsel %vm453, %v447, 0.0
      %v458 = vadd.f32 %v456, %v457
      %v459 = vsel %vm453, %v448, 0.0
      %v460 = vadd.f32 %v458, %v459
      %v461 = vsel %vm453, %v449, 0.0
      %v462 = vadd.f32 %v460, %v461
      %v463 = vsel %vm453, %v450, 0.0
      %v464 = vadd.f32 %v462, %v463
      %v465 = vsel %vm453, %v451, 0.0
      %v466 = vadd.f32 %v464, %v465
      %v467 = vsel %vm453, %v452, 0.0
      %v468 = vadd.f32 %v466, %v467
      %v469 = vrot.slane %v468, 4
      %v470 = vadd.f32 %v468, %v469
      %v471 = vrot.slane %v470, 2
      %v472 = vadd.f32 %v470, %v471
      %v473 = vrot.slane %v472, 1
      %v474 = vadd.f32 %v472, %v473
      %v475 = vmul.f32 %v474, 0.015625
      %v476 = vsub.f32 %v445, %v475
      %v477 = vsub.f32 %v446, %v475
      %v478 = vsub.f32 %v447, %v475
      %v479 = vsub.f32 %v448, %v475
      %v480 = vsub.f32 %v449, %v475
      %v481 = vsub.f32 %v450, %v475
      %v482 = vsub.f32 %v451, %v475
      %v483 = vsub.f32 %v452, %v475
      %v484 = vmul.f32 %v476, %v476
      %v485 = vmul.f32 %v477, %v477
      %v486 = vmul.f32 %v478, %v478
      %v487 = vmul.f32 %v479, %v479
      %v488 = vmul.f32 %v480, %v480
      %v489 = vmul.f32 %v481, %v481
      %v490 = vmul.f32 %v482, %v482
      %v491 = vmul.f32 %v483, %v483
      %v492 = vsel %vm453, %v484, 0.0
      %v493 = vsel %vm453, %v485, 0.0
      %v494 = vadd.f32 %v492, %v493
      %v495 = vsel %vm453, %v486, 0.0
      %v496 = vadd.f32 %v494, %v495
      %v497 = vsel %vm453, %v487, 0.0
      %v498 = vadd.f32 %v496, %v497
      %v499 = vsel %vm453, %v488, 0.0
      %v500 = vadd.f32 %v498, %v499
      %v501 = vsel %vm453, %v489, 0.0
      %v502 = vadd.f32 %v500, %v501
      %v503 = vsel %vm453, %v490, 0.0
      %v504 = vadd.f32 %v502, %v503
      %v505 = vsel %vm453, %v491, 0.0
      %v506 = vadd.f32 %v504, %v505
      %v507 = vrot.slane %v506, 4
      %v508 = vadd.f32 %v506, %v507
      %v509 = vrot.slane %v508, 2
      %v510 = vadd.f32 %v508, %v509
      %v511 = vrot.slane %v510, 1
      %v512 = vadd.f32 %v510, %v511
      %v513 = vmul.f32 %v512, 0.015625
      %v514 = vadd.f32 %v513, 1e-05
      %v515 = vrsqrt.pop %v514
      %v516 = vmul.f32 %v515, %v514
      %v517 = vmul.f32 %v516, %v515
      %v518 = vmul.f32 0.5, %v517
      %v519 = vsub.f32 1.5, %v518
      %v520 = vmul.f32 %v515, %v519
      %vm521 = vweird.f32 %v514
      %vm522 = vweird.f32 %v515
      %vm523 = vmor %vm521, %vm522
      %v524 = vsel %vm523, %v515, %v520
      %v525 = vmul.f32 %v476, %v524
      %v526 = vmul.f32 %v477, %v524
      %v527 = vmul.f32 %v478, %v524
      %v528 = vmul.f32 %v479, %v524
      %v529 = vmul.f32 %v480, %v524
      %v530 = vmul.f32 %v481, %v524
      %v531 = vmul.f32 %v482, %v524
      %v532 = vmul.f32 %v483, %v524
      %vm533 = vcmp.ge.f32.partialorder %v525, 0.0
      %vm534 = vcmp.ge.f32.partialorder %v526, 0.0
      %vm535 = vcmp.ge.f32.partialorder %v527, 0.0
      %vm536 = vcmp.ge.f32.partialorder %v528, 0.0
      %vm537 = vcmp.ge.f32.partialorder %v529, 0.0
      %vm538 = vcmp.ge.f32.partialorder %v530, 0.0
      %vm539 = vcmp.ge.f32.partialorder %v531, 0.0
      %vm540 = vcmp.ge.f32.partialorder %v532, 0.0
      %v541 = vmul.f32 %v525, 0.2
      %v542 = vmul.f32 %v526, 0.2
      %v543 = vmul.f32 %v527, 0.2
      %v544 = vmul.f32 %v528, 0.2
      %v545 = vmul.f32 %v529, 0.2
      %v546 = vmul.f32 %v530, 0.2
      %v547 = vmul.f32 %v531, 0.2
      %v548 = vmul.f32 %v532, 0.2
      %v549 = vsel %vm533, %v525, %v541
      %v550 = vsel %vm534, %v526, %v542
      %v551 = vsel %vm535, %v527, %v543
      %v552 = vsel %vm536, %v528, %v544
      %v553 = vsel %vm537, %v529, %v545
      %v554 = vsel %vm538, %v530, %v546
      %v555 = vsel %vm539, %v531, %v547
      %v556 = vsel %vm540, %v532, %v548
      %v557 = vpack.c.bf16 %v549, %v549
      %v558 = vpack.c.bf16 %v550, %v550
      %v559 = vpack.c.bf16 %v551, %v551
      %v560 = vpack.c.bf16 %v552, %v552
      %v561 = vpack.c.bf16 %v553, %v553
      %v562 = vpack.c.bf16 %v554, %v554
      %v563 = vpack.c.bf16 %v555, %v555
      %v564 = vpack.c.bf16 %v556, %v556
      %vm565 = vcmask 60416
      %566 = vst.msk [vmem:[%s143] sm:$0xf] %vm565, %v557
      %567 = vst.msk [vmem:[%s143 + $0x4] sm:$0xf] %vm565, %v558
      %568 = vst.msk [vmem:[%s143 + $0x8] sm:$0xf] %vm565, %v559
      %569 = vst.msk [vmem:[%s143 + $0xc] sm:$0xf] %vm565, %v560
      %570 = vst.msk [vmem:[%s143 + $0x10] sm:$0xf] %vm565, %v561
      %571 = vst.msk [vmem:[%s143 + $0x14] sm:$0xf] %vm565, %v562
      %572 = vst.msk [vmem:[%s143 + $0x18] sm:$0xf] %vm565, %v563
      %573 = vst.msk [vmem:[%s143 + $0x1c] sm:$0xf] %vm565, %v564
      %p574 = scmp.lt.s32.totalorder %s13, 1
      %s575 = scalar_select %p574, %s13, 1
      %s576 = smul.addr %s575, 8
      %s577 = smul.addr %s576, 4
      %s578 = scalar_lea.vmem %s2, %s577
      // Predicated region
      $region29: #{unet_down.1} parent=27 // pred_check
        %p579 = pneg %p78
      $region30: #{unet_down.1} parent=27 // pred_check_branch
        %581 = sbr.rel (%p579) target = $region32
      $region31: #{unet_down.1} parent=27 // pred_region
        _
      $region32: #{unet_down.1} parent=27 // pred_fallthru
        _
    $region28: #{unet_down.1} parent=5 // pred_fallthru
      _
    %p582 = scmp.le.s32.totalorder 2, %s8
    // Predicated region
    $region33: #{unet_down.1} parent=5 // pred_check
      %p583 = pneg %p582
    $region34: #{unet_down.1} parent=5 // pred_check_branch
      %585 = sbr.rel (%p583) target = $region36
    $region35: #{unet_down.1} parent=5 // pred_region
      %s586 = ssub.s32 %s8, 2
      // Predicated region
      $region37: #{unet_down.1} parent=35 // pred_check
        %p587 = pneg %p84
      $region38: #{unet_down.1} parent=35 // pred_check_branch
        %589 = sbr.rel (%p587) target = $region40
      $region39: #{unet_down.1} parent=35 // pred_region
        %p590 = scmp.lt.s32.totalorder %s14, 1
        %s591 = scalar_select %p590, %s14, 1
        %s592 = smul.addr %s591, 8
        %s593 = smul.addr %s592, 4
        %s594 = scalar_lea.vmem %s2, %s593
      $region40: #{unet_down.1} parent=35 // pred_fallthru
        _
    $region36: #{unet_down.1} parent=5 // pred_fallthru
      _
  $region6: #{unet_down.1} parent=0 // loop_footer
    %s12 = sadd.s32 1, %s8
  $region7: #{unet_down.1} parent=0 // loop_footer_branch
    %7 = sbr.rel target = $region3
  $region8: #{unet_down.1} parent=0 // loop_exit
    _

</llo_original>
